<compile_context>
chip_gen: v7x
topology: tpu7x:2x2x1
jax: 0.10.0
libtpu: 0.0.40
codegen_flags: <defaults>
</compile_context>

<pallas_src>
import functools

import jax
import jax.numpy as jnp
from jax import lax
from jax.experimental import pallas as pl
from jax.experimental.pallas import tpu as pltpu

K_NN = 5
MOMENTUM = 0.99

# Running top-K region is padded to a full 128-lane block so the fresh bank
# tile lands at a lane-aligned offset inside the persistent slabs.
_K_PAD = 128
_NEG = -1e30  # python float literal (a jnp scalar here would be a captured const)


# ----------------------------------------------------------------------------
# Small helpers
# ----------------------------------------------------------------------------
def _pick_tile(dim, target):
    """Largest multiple of 128 that divides `dim` and is <= `target`."""
    assert dim % 128 == 0, dim
    t = max(128, min(target, dim))
    t -= t % 128
    while t > 128 and dim % t:
        t -= 128
    assert dim % t == 0
    return t


def _vmem_bytes():
    try:
        return pltpu.get_tpu_info().vmem_capacity_bytes
    except Exception:
        return 64 << 20  # conservative (v7x-sized) fallback


# ----------------------------------------------------------------------------
# Tiled linear (+ fused epilogue) kernel — P3 pattern.
# grid = (N-tiles [parallel], K-tiles [arbitrary/reduction]); f32 accumulator.
# ----------------------------------------------------------------------------
def _linear_kernel(x_ref, w_ref, b_ref, g_ref, bt_ref, o_ref, acc_ref, *, epilogue):
    k = pl.program_id(1)

    @pl.when(k == 0)
    def _():
        acc_ref[...] = jnp.zeros_like(acc_ref)

    acc_ref[...] += jnp.dot(x_ref[...], w_ref[...],
                            preferred_element_type=jnp.float32)

    @pl.when(k == pl.num_programs(1) - 1)
    def _():
        h = acc_ref[...] + b_ref[...]
        if epilogue == "bn_relu":
            # nn.BatchNorm1d training batch stats (biased var, eps=1e-5) + ReLU.
            mean = jnp.mean(h, axis=0, keepdims=True)
            var = jnp.mean(jnp.square(h - mean), axis=0, keepdims=True)
            h = jnp.maximum(
                (h - mean) * lax.rsqrt(var + 1e-5) * g_ref[...] + bt_ref[...], 0.0)
        elif epilogue == "l2":
            # F.normalize(dim=1, eps=1e-12) as x * rsqrt(max(sum x^2, eps^2)).
            h = h * lax.rsqrt(jnp.maximum(jnp.sum(h * h, axis=-1, keepdims=True),
                                          1e-24))
        o_ref[...] = h.astype(o_ref.dtype)


def linear(x, w, b, gamma=None, beta=None, *, epilogue="bias",
           out_dtype=jnp.bfloat16, tile_n=512, tile_k=512):
    """y = epilogue(x @ w + b); weights streamed in (tile_k, tile_n) blocks."""
    B, K = x.shape
    Kw, N = w.shape
    assert K == Kw
    tn = _pick_tile(N, tile_n)
    tk = _pick_tile(K, tile_k)
    if epilogue == "l2":
        tn = N  # row-wise L2 needs the whole feature dim in one N tile
    if gamma is None:
        gamma = jnp.ones((1, N), jnp.float32)
    if beta is None:
        beta = jnp.zeros((1, N), jnp.float32)

    kernel = functools.partial(_linear_kernel, epilogue=epilogue)
    return pl.pallas_call(
        kernel,
        grid=(N // tn, K // tk),
        out_shape=jax.ShapeDtypeStruct((B, N), out_dtype),
        in_specs=[
            pl.BlockSpec((B, tk), lambda n, k: (0, k)),   # activations
            pl.BlockSpec((tk, tn), lambda n, k: (k, n)),  # streamed weight tile
            pl.BlockSpec((1, tn), lambda n, k: (0, n)),   # bias
            pl.BlockSpec((1, tn), lambda n, k: (0, n)),   # bn gamma
            pl.BlockSpec((1, tn), lambda n, k: (0, n)),   # bn beta
        ],
        out_specs=pl.BlockSpec((B, tn), lambda n, k: (0, n)),
        scratch_shapes=[pltpu.VMEM((B, tn), jnp.float32)],
        compiler_params=pltpu.CompilerParams(
            dimension_semantics=("parallel", "arbitrary")),
    )(x.astype(jnp.bfloat16), w.astype(jnp.bfloat16),
      b.reshape(1, N).astype(jnp.float32),
      gamma.reshape(1, N).astype(jnp.float32),
      beta.reshape(1, N).astype(jnp.float32))


# ----------------------------------------------------------------------------
# Encoder branches: chains of tiled linear kernels (no all-resident weights).
# ----------------------------------------------------------------------------
def query_branch(x_flat, params):
    # backbone stub -> q_encoder.fc projector -> q_prediction_head -> L2.
    bk, fc, pr = params["backbone"], params["fc"], params["pred"]
    feat = linear(x_flat, bk["w"], bk["b"])
    h = linear(feat, fc["w1"], fc["b1"], fc["gamma"], fc["beta"], epilogue="bn_relu")
    z = linear(h, fc["w2"], fc["b2"])
    h2 = linear(z, pr["w1"], pr["b1"], pr["gamma"], pr["beta"], epilogue="bn_relu")
    return linear(h2, pr["w2"], pr["b2"], epilogue="l2")


def target_branch(x_flat, params):
    # backbone stub -> t_encoder.fc projector -> L2.
    bk, fc = params["backbone"], params["fc"]
    feat = linear(x_flat, bk["w"], bk["b"])
    h = linear(feat, fc["w1"], fc["b1"], fc["gamma"], fc["beta"], epilogue="bn_relu")
    return linear(h, fc["w2"], fc["b2"], epilogue="l2")


# ----------------------------------------------------------------------------
# Streamed top-K / loss / purity kernel (grid over the memory bank)
# ----------------------------------------------------------------------------
def _meanshift_loss_kernel(qt_ref, queue_ref, qlab_ref, lab_ref,
                           loss_ref, purity_ref,
                           cs_ref, cq_ref, cl_ref, iota_ref):
    step = pl.program_id(0)
    last = pl.num_programs(0) - 1
    B = qt_ref.shape[0] // 2
    tile_m = queue_ref.shape[1]

    @pl.when(step == 0)
    def _():
        # Init the running top-K region (lanes [:K_PAD]) and the column iota.
        cs_ref[:, :_K_PAD] = jnp.full((B, _K_PAD), _NEG, jnp.float32)
        cq_ref[:, :_K_PAD] = jnp.zeros((B, _K_PAD), jnp.float32)
        cl_ref[:, :_K_PAD] = jnp.full((B, _K_PAD), -1, jnp.int32)
        iota_ref[...] = lax.broadcasted_iota(jnp.int32, iota_ref.shape, 1)

    # ONE fused (2B, C) @ (C, tile_m) similarity matmul (rows [:B] = target,
    # rows [B:] = query); the bank is stored (C, M) so no transpose is needed
    # and the result tile is lane-dense.
    sim = jnp.dot(qt_ref[...], queue_ref[...], preferred_element_type=jnp.float32)
    cs_ref[:, _K_PAD:] = sim[:B, :]                                   # t-sims
    cq_ref[:, _K_PAD:] = sim[B:, :]                                   # q-sims
    cl_ref[:, _K_PAD:] = jnp.broadcast_to(qlab_ref[...], (B, tile_m))  # bank labels

    # Merge running top-K with this tile over the single persistent slab
    # (no per-step concatenates). Ties pick the lowest index (torch.topk tie
    # order is unspecified).
    cand_sim, cand_qsim, cand_lab = cs_ref[...], cq_ref[...], cl_ref[...]
    iota = iota_ref[...]
    width = cand_sim.shape[1]

    work = cand_sim
    sel_qsims, sel_labs = [], []
    for k in range(K_NN):
        mx = jnp.max(work, axis=-1, keepdims=True)
        idx = jnp.min(jnp.where(work == mx, iota, width), axis=-1, keepdims=True)
        sel = iota == idx                                  # one-hot first max
        s_sim = jnp.sum(jnp.where(sel, cand_sim, 0.0), axis=-1, keepdims=True)
        s_qsim = jnp.sum(jnp.where(sel, cand_qsim, 0.0), axis=-1, keepdims=True)
        s_lab = jnp.sum(jnp.where(sel, cand_lab, 0), axis=-1, keepdims=True)
        sel_qsims.append(s_qsim)
        sel_labs.append(s_lab)
        work = jnp.where(sel, _NEG, work)
        # Persist the merged top-K back into the running region
        # (lanes K_NN.._K_PAD keep their -inf / 0 / -1 pads).
        cs_ref[:, k:k + 1] = s_sim
        cq_ref[:, k:k + 1] = s_qsim
        cl_ref[:, k:k + 1] = s_lab

    @pl.when(step == last)
    def _():
        q_nn_sum = sum(sel_qsims)                          # (B, 1)
        match = sum([(sl == lab_ref[...]).astype(jnp.float32) for sl in sel_labs])
        # loss = mean_b( sum_k (2 - 2*q_sim_k) / K ); affine only on (B,K) sums.
        per_row_loss = (2.0 * K_NN - 2.0 * q_nn_sum) / K_NN
        loss_ref[...] = jnp.mean(per_row_loss, keepdims=True)
        purity_ref[...] = jnp.mean(match / K_NN, keepdims=True)


def meanshift_loss(q_proj, current_target, queue_t, queue_labels, labels, *,
                   tile_m_target=None):
    # TODO(synk): on v7x, split the bank stream across the 2 TensorCores
    # (leading "parallel" grid axis / core_map) with a K-of-2K merge epilogue.
    # TODO(synk): optionally quantize the bank (int8 on v5e/v6e, fp8 e4m3 on
    # v7x) for another ~2x on the HBM stream.
    B, C = q_proj.shape
    M = queue_t.shape[1]
    if tile_m_target is None:
        # Big tiles amortize the ~0.35us per-grid-step overhead; re-derive for
        # the 64 MiB-VMEM generation (v7x) vs the 128 MiB ones (v5e/v6e).
        tile_m_target = 2560 if _vmem_bytes() <= (64 << 20) else 5120
    tile_m = _pick_tile(M, tile_m_target)
    width = _K_PAD + tile_m

    # Fuse the two similarity matmuls: one (2B, C) LHS, rows [:B]=target, [B:]=query.
    qt = jnp.concatenate([current_target, q_proj], axis=0).astype(jnp.bfloat16)
    qlab = queue_labels.reshape(1, M).astype(jnp.int32)
    lab = labels.reshape(B, 1).astype(jnp.int32)

    # Explicit scoped-VMEM budget: double-buffered streamed tiles + persistent
    # slabs, x2 headroom, clamped to stay inside every generation's VMEM.
    need = (2 * C * tile_m * 2          # bank tile (bf16, double-buffered)
            + 2 * 8 * tile_m * 4        # label tile (i32, sublane-padded, x2)
            + 4 * B * width * 4         # 3 candidate slabs + iota scratch
            + 2 * 2 * B * C * 2)        # resident (2B, C) bf16 LHS (x2 bufs)
    vmem_limit = int(min(max(2 * need + (4 << 20), 16 << 20), 48 << 20))

    loss, purity = pl.pallas_call(
        _meanshift_loss_kernel,
        grid=(M // tile_m,),
        out_shape=(jax.ShapeDtypeStruct((1, 1), jnp.float32),
                   jax.ShapeDtypeStruct((1, 1), jnp.float32)),
        in_specs=[
            pl.BlockSpec((2 * B, C), lambda i: (0, 0)),   # target+query (resident)
            pl.BlockSpec((C, tile_m), lambda i: (0, i)),  # streamed bank tile
            pl.BlockSpec((1, tile_m), lambda i: (0, i)),  # streamed label tile
            pl.BlockSpec((B, 1), lambda i: (0, 0)),       # query labels (resident)
        ],
        out_specs=(pl.BlockSpec((1, 1), lambda i: (0, 0)),
                   pl.BlockSpec((1, 1), lambda i: (0, 0))),
        scratch_shapes=[pltpu.VMEM((B, width), jnp.float32),  # cand t-sims
                        pltpu.VMEM((B, width), jnp.float32),  # cand q-sims
                        pltpu.VMEM((B, width), jnp.int32),    # cand labels
                        pltpu.VMEM((B, width), jnp.int32)],   # column iota
        compiler_params=pltpu.CompilerParams(
            dimension_semantics=("arbitrary",),
            vmem_limit_bytes=vmem_limit),
    )(qt, queue_t, qlab, lab)
    return loss[0, 0], purity[0, 0]


# ----------------------------------------------------------------------------
# Queue enqueue: in-place (donated) insert instead of a full-bank HBM copy.
# ----------------------------------------------------------------------------
@functools.partial(jax.jit, donate_argnums=(0, 1))
def _enqueue(queue_t, queue_labels, new_cols, new_labels, ptr):
    queue_t = lax.dynamic_update_slice(queue_t, new_cols, (0, ptr))
    queue_labels = lax.dynamic_update_slice(queue_labels, new_labels, (ptr,))
    return queue_t, queue_labels


# ----------------------------------------------------------------------------
# Parameter / state setup (deterministic, synthetic)
# ----------------------------------------------------------------------------
def init_params(key, in_features, img_flat):
    hidden = in_features * 2        # q_encoder.fc.in_features * 2
    proj = in_features // 4         # q_encoder.fc.in_features // 4
    ks = jax.random.split(key, 5)

    def lin(k, din, dout, scale=0.05):
        return jax.random.normal(k, (din, dout), jnp.float32) * scale

    def proj_params(k1, k2, din, h, dout):
        return {
            "w1": lin(k1, din, h),
            "b1": jnp.zeros((1, h), jnp.float32),
            "gamma": jnp.ones((1, h), jnp.float32),
            "beta": jnp.zeros((1, h), jnp.float32),
            "w2": lin(k2, h, dout),
            "b2": jnp.zeros((1, dout), jnp.float32),
        }

    return {
        # TODO(synk): resnet50 backbone not translated; replaced by a flatten+
        # linear stub so the projector / streamed-distance / top-k hot path is
        # exercised end-to-end.
        "backbone": {"w": lin(ks[0], img_flat, in_features),
                     "b": jnp.zeros((1, in_features), jnp.float32)},
        "fc": proj_params(ks[1], ks[2], in_features, hidden, proj),
        "pred": proj_params(ks[3], ks[4], proj, hidden, proj),
    }


# ----------------------------------------------------------------------------
# MeanShift.forward
# ----------------------------------------------------------------------------
def meanshift_forward(q_img, t_img, labels, q_params, t_params, state, shuffle_key):
    m = MOMENTUM
    B = q_img.shape[0]

    # Momentum update of the target encoder (f32 master weights, plain JAX glue).
    t_params = jax.tree_util.tree_map(
        lambda t, q: t * m + q * (1.0 - m),
        t_params,
        {"backbone": q_params["backbone"], "fc": q_params["fc"]},
    )

    # Query branch: backbone stub -> fc projector -> prediction head -> L2 norm.
    q_proj = query_branch(q_img.reshape(B, -1), q_params)

    # Target branch (shuffle-BN trick in glue).
    shuffle_ids = jax.random.permutation(shuffle_key, B)
    reverse_ids = jnp.argsort(shuffle_ids)
    current_target = target_branch(t_img[shuffle_ids].reshape(B, -1), t_params)
    current_target = lax.stop_gradient(current_target[reverse_ids])

    # Dequeue & enqueue into the transposed (C, M) bank before the loss (matches
    # the reference: the bank already contains the current targets).
    queue_t, queue_labels = _enqueue(
        state["queue_t"], state["labels"],
        current_target.T.astype(state["queue_t"].dtype),
        labels.astype(jnp.int32), state["ptr"])
    new_ptr = (state["ptr"] + B) % queue_t.shape[1]

    # Streamed distances / top-k / loss / purity.
    loss, purity = meanshift_loss(q_proj, current_target, queue_t, queue_labels,
                                  labels)

    new_state = {"queue_t": queue_t, "labels": queue_labels, "ptr": new_ptr}
    return loss, purity, t_params, new_state


# ----------------------------------------------------------------------------
if __name__ == "__main__":
    key = jax.random.PRNGKey(0)
    k_img, k_timg, k_lab, k_param, k_queue, k_shuf = jax.random.split(key, 6)

    # Lane/sublane-aligned toy shapes (B multiple of 8, features multiples of 128).
    B, C, H, W = 8, 3, 16, 16
    in_features = 512           # stand-in for resnet50 fc.in_features (2048)
    memory_bank_size = 8192     # stand-in for 128000; streams over several tiles
    proj_dim = in_features // 4

    q_img = jax.random.normal(k_img, (B, C, H, W), jnp.float32)
    t_img = jax.random.normal(k_timg, (B, C, H, W), jnp.float32)
    labels = jax.random.randint(k_lab, (B,), 0, 10, jnp.int32)

    q_params = init_params(k_param, in_features, C * H * W)
    # t_encoder initialized as an exact copy of q_encoder (requires_grad=False).
    t_params = {"backbone": q_params["backbone"], "fc": q_params["fc"]}

    queue = jax.random.normal(k_queue, (memory_bank_size, proj_dim), jnp.float32)
    queue = queue / jnp.maximum(jnp.linalg.norm(queue, axis=1, keepdims=True), 1e-12)
    state = {
        # Memory bank stored transposed (proj_dim, M) in bf16 for streaming.
        "queue_t": queue.T.astype(jnp.bfloat16),
        "labels": -jnp.ones((memory_bank_size,), jnp.int32),
        "ptr": jnp.int32(0),
    }

    loss, purity, _, _ = meanshift_forward(
        q_img, t_img, labels, q_params, t_params, state, k_shuf)
    jax.block_until_ready((loss, purity))
    print("KERNEL_OK")
</pallas_src>

<mosaic_0001>
module attributes {stable_mosaic.version = 11 : i64} {
  func.func @_linear_kernel(%arg0: i32, %arg1: i32, %arg2: memref<8x384xbf16, #tpu.memory_space<vmem>>, %arg3: memref<384x512xbf16, #tpu.memory_space<vmem>>, %arg4: memref<1x512xf32, #tpu.memory_space<vmem>>, %arg5: memref<1x512xf32, #tpu.memory_space<vmem>>, %arg6: memref<1x512xf32, #tpu.memory_space<vmem>>, %arg7: memref<8x512xbf16, #tpu.memory_space<vmem>>, %arg8: memref<8x512xf32, #tpu.memory_space<vmem>>) attributes {dimension_semantics = [#tpu.dimension_semantics<parallel>, #tpu.dimension_semantics<arbitrary>], iteration_bounds = array<i64: 1, 2>, scalar_prefetch = 0 : i64, scratch_operands = 1 : i64, tpu.core_type = #tpu.core_type<tc>, window_params = [{transform_indices = @transform_0, window_bounds = array<i64: 8, 384>}, {transform_indices = @transform_1, window_bounds = array<i64: 384, 512>}, {transform_indices = @transform_2, window_bounds = array<i64: 1, 512>}, {transform_indices = @transform_3, window_bounds = array<i64: 1, 512>}, {transform_indices = @transform_4, window_bounds = array<i64: 1, 512>}, {transform_indices = @transform_5, window_bounds = array<i64: 8, 512>}]} {
    %c0_i32 = arith.constant 0 : i32
    %0 = arith.cmpi eq, %arg1, %c0_i32 : i32
    %1 = arith.extui %0 : i1 to i32
    %c0_i32_0 = arith.constant 0 : i32
    %2 = arith.cmpi ne, %1, %c0_i32_0 : i32
    scf.if %2 {
      %cst_9 = arith.constant 0.000000e+00 : f32
      %12 = vector.broadcast %cst_9 : f32 to vector<8x512xf32>
      %c0_10 = arith.constant 0 : index
      %c0_11 = arith.constant 0 : index
      %13 = vector.load %arg8[%c0_10, %c0_11] : memref<8x512xf32, #tpu.memory_space<vmem>>, vector<8x512xf32>
      tpu.vector_store %arg8[%c0_10, %c0_11], %12 {strides = array<i32>} : memref<8x512xf32, #tpu.memory_space<vmem>>, vector<8x512xf32>,
    } else {
    }
    %c0 = arith.constant 0 : index
    %c0_1 = arith.constant 0 : index
    %3 = vector.load %arg8[%c0, %c0_1] : memref<8x512xf32, #tpu.memory_space<vmem>>, vector<8x512xf32>
    %c0_2 = arith.constant 0 : index
    %c0_3 = arith.constant 0 : index
    %4 = vector.load %arg2[%c0_2, %c0_3] : memref<8x384xbf16, #tpu.memory_space<vmem>>, vector<8x384xbf16>
    %c0_4 = arith.constant 0 : index
    %c0_5 = arith.constant 0 : index
    %5 = vector.load %arg3[%c0_4, %c0_5] : memref<384x512xbf16, #tpu.memory_space<vmem>>, vector<384x512xbf16>
    %cst = arith.constant dense<0.000000e+00> : vector<8x512xf32>
    %6 = tpu.matmul %4, %5, %cst {dimension_numbers = #tpu.dot_dimension_numbers<[1], [0], [0], [1], [0, 0, 1, 1], [], []>} : vector<8x384xbf16>, vector<384x512xbf16>, vector<8x512xf32> -> vector<8x512xf32>
    %7 = arith.addf %3, %6 : vector<8x512xf32>
    %c0_6 = arith.constant 0 : index
    %c0_7 = arith.constant 0 : index
    %8 = vector.load %arg8[%c0_6, %c0_7] : memref<8x512xf32, #tpu.memory_space<vmem>>, vector<8x512xf32>
    tpu.vector_store %arg8[%c0_6, %c0_7], %7 {strides = array<i32>} : memref<8x512xf32, #tpu.memory_space<vmem>>, vector<8x512xf32>,
    %c1_i32 = arith.constant 1 : i32
    %9 = arith.cmpi eq, %arg1, %c1_i32 : i32
    %10 = arith.extui %9 : i1 to i32
    %c0_i32_8 = arith.constant 0 : i32
    %11 = arith.cmpi ne, %10, %c0_i32_8 : i32
    scf.if %11 {
      %c0_9 = arith.constant 0 : index
      %c0_10 = arith.constant 0 : index
      %12 = vector.load %arg8[%c0_9, %c0_10] : memref<8x512xf32, #tpu.memory_space<vmem>>, vector<8x512xf32>
      %c0_11 = arith.constant 0 : index
      %c0_12 = arith.constant 0 : index
      %13 = vector.load %arg4[%c0_11, %c0_12] : memref<1x512xf32, #tpu.memory_space<vmem>>, vector<1x512xf32>
      %14 = vector.broadcast %13 : vector<1x512xf32> to vector<8x512xf32>
      %15 = arith.addf %12, %14 : vector<8x512xf32>
      %16 = arith.truncf %15 : vector<8x512xf32> to vector<8x512xbf16>
      %c0_13 = arith.constant 0 : index
      %c0_14 = arith.constant 0 : index
      %17 = vector.load %arg7[%c0_13, %c0_14] : memref<8x512xbf16, #tpu.memory_space<vmem>>, vector<8x512xbf16>
      tpu.vector_store %arg7[%c0_13, %c0_14], %16 {strides = array<i32>} : memref<8x512xbf16, #tpu.memory_space<vmem>>, vector<8x512xbf16>,
    } else {
    }
    return
  }
  func.func @transform_0(%arg0: i32, %arg1: i32) -> (i32, i32) {
    %c0_i32 = arith.constant 0 : i32
    %c0_i32_0 = arith.constant 0 : i32
    return %c0_i32, %arg1 : i32, i32
  }
  func.func @transform_1(%arg0: i32, %arg1: i32) -> (i32, i32) {
    %c0_i32 = arith.constant 0 : i32
    return %arg1, %arg0 : i32, i32
  }
  func.func @transform_2(%arg0: i32, %arg1: i32) -> (i32, i32) {
    %c0_i32 = arith.constant 0 : i32
    %c0_i32_0 = arith.constant 0 : i32
    return %c0_i32, %arg0 : i32, i32
  }
  func.func @transform_3(%arg0: i32, %arg1: i32) -> (i32, i32) {
    %c0_i32 = arith.constant 0 : i32
    %c0_i32_0 = arith.constant 0 : i32
    return %c0_i32, %arg0 : i32, i32
  }
  func.func @transform_4(%arg0: i32, %arg1: i32) -> (i32, i32) {
    %c0_i32 = arith.constant 0 : i32
    %c0_i32_0 = arith.constant 0 : i32
    return %c0_i32, %arg0 : i32, i32
  }
  func.func @transform_5(%arg0: i32, %arg1: i32) -> (i32, i32) {
    %c0_i32 = arith.constant 0 : i32
    %c0_i32_0 = arith.constant 0 : i32
    return %c0_i32, %arg0 : i32, i32
  }
}

</mosaic_0001>

<llo_original>
// kernel: tpu_custom_call.1
$region0: #{tpu_custom_call.1}
  #allocation0 [shape = 'u32[]', space=smem, size = 0x4, offset = 0x4, fixed_abs, tag = 'smem constant byte address 0x4 - core index']
  #allocation1 [shape = 'u32[144,128]{1,0:T(1,128)}', space=vmem, size = 0x12000, scoped, tag = 'internal scratch']
  #allocation2 [shape = 'f32[8,512]{1,0:T(8,128)}', space=vmem, size = 0x4000, scoped, tag = 'scratch operand']
  %s0 = inlined_call_operand.hbm [shape: bf16[8,768], index: 0, kind: input, shape index: {}]
  %s1 = inlined_call_operand.hbm [shape: bf16[768,512], index: 1, kind: input, shape index: {}]
  %s2 = inlined_call_operand.vmem [shape: f32[1,512], index: 2, kind: input, shape index: {}]
  %s3 = inlined_call_operand.vmem [shape: f32[1,512], index: 3, kind: input, shape index: {}]
  %s4 = inlined_call_operand.vmem [shape: f32[1,512], index: 4, kind: input, shape index: {}]
  %s5 = inlined_call_operand.hbm [shape: bf16[8,512], index: 5, kind: output, shape index: {}]
  %s6 = sld [smem:[#allocation0]]
  $region69: #{tpu_custom_call.1} parent=0
    _
  %s8 = ssub.s32 1, %s6
  %s9 = scalar_select 0, %s8, %s6
  $region1: #{tpu_custom_call.1} parent=0
    #allocation3 [shape = 'u8[12288]{0}', space=vmem, size = 0x3000, scoped, tag = 'input window, operand 0']
    #allocation4 [shape = 's32[2]{0}', space=sflag, size = 0x8, scoped, tag = 'scoped memory for tpu_custom_call.1']
    #allocation5 [shape = 's32[2]{0}', space=sflag, size = 0x8, scoped, tag = 'scoped memory for tpu_custom_call.1']
    #allocation6 [shape = 'u8[786432]{0}', space=vmem, size = 0xc0000, scoped, tag = 'input window, operand 1']
    #allocation7 [shape = 's32[2]{0}', space=sflag, size = 0x8, scoped, tag = 'scoped memory for tpu_custom_call.1']
    #allocation8 [shape = 'u8[8192]{0}', space=vmem, size = 0x2000, scoped, tag = 'output window, operand 0, single buffered']
    %10 = vsyncpa [#allocation4], 0
    %s11 = scalar_lea.sflag [#allocation4], 1
    %12 = vsyncpa %s11, 0
    %13 = vsyncpa [#allocation7], 0
    %s14 = scalar_lea.sflag [#allocation7], 1
    %15 = vsyncpa %s14, 0
    %16 = vsyncpa [#allocation5], 0
    loop: start=0, step=1, limit=4
    $region2: #{tpu_custom_call.1} parent=1 // loop_pre_header
      _
    $region3: #{tpu_custom_call.1} parent=1 // loop_header
      %s18 = sphi 0, %s22
      %p19 = scmp.ge.s32.totalorder %s18, 4
      %s25 = sphi 0, %s37
      %s26 = sphi 0, %s33
      %s27 = sphi 0, %s25
      %s28 = sphi 0, %s26
      %s29 = sphi 0, %s27
      %s30 = sphi 0, %s28
      %s40 = sphi 0, %s42
      %s43 = sphi 0, %s40
      %s44 = sphi 0, %s43
      %s60 = sphi 0, %s44
      %s68 = sphi 0, %s70
      %s71 = sphi 0, %s68
      %s72 = sphi 0, %s71
      %s88 = sphi 0, %s72
      %s94 = sphi 0, %s96
      %s97 = sphi 0, %s94
      %s98 = sphi 0, %s97
      %s114 = sphi 0, %s98
      %s120 = sphi 0, %s122
      %s123 = sphi 0, %s120
      %s124 = sphi 0, %s123
      %s140 = sphi 0, %s124
      %s146 = sphi 0, %s148
      %s149 = sphi 0, %s146
      %s150 = sphi 0, %s149
      %s166 = sphi 0, %s150
      %s172 = sphi 0, %s174
      %s175 = sphi 0, %s172
      %s176 = sphi 0, %s175
      %s192 = sphi 0, %s176
    $region4: #{tpu_custom_call.1} parent=1 // loop_header_branch
      %21 = sbr.rel (%p19) target = $region8
    $region5: #{tpu_custom_call.1} parent=1 // loop_body
      %s23 = ssub.s32 %s18, 1
      %s24 = ssub.s32 %s18, 2
      %s31 = sadd.s32 1, %s26
      %p32 = scmp.ge.s32.totalorder %s31, 2
      %s33 = scalar_select %p32, 0, %s31
      %s34 = sadd.s32 1, %s25
      %s35 = scalar_select %p32, %s34, %s25
      %p36 = scmp.ge.s32.totalorder %s35, 1
      %s37 = scalar_select %p36, 0, %s35
      %s38 = ssub.s32 %s26, %s33
      %p39 = scmp.eq.s32.totalorder %s38, 0
      %s41 = sadd.s32 %s40, 1
      %s42 = scalar_select %p39, %s40, %s41
      %p45 = pneg %p39
      %p46 = scmp.eq.s32.totalorder %s18, 1
      %p47 = por %p45, %p46
      %p48 = scmp.ne.s32.totalorder %s40, %s43
      %p49 = scmp.eq.s32.totalorder %s18, 0
      %p50 = por %p48, %p49
      %p51 = scmp.ne.s32.totalorder %s40, %s43
      %p52 = scmp.eq.s32.totalorder %s23, 1
      %p53 = por %p51, %p52
      %p54 = scmp.ne.s32.totalorder %s43, %s44
      %p55 = scmp.eq.s32.totalorder %s23, 0
      %p56 = por %p54, %p55
      %p57 = scmp.ne.s32.totalorder %s43, %s44
      %p58 = scmp.eq.s32.totalorder %s24, 1
      %p59 = por %p57, %p58
      %p61 = scmp.ne.s32.totalorder %s44, %s60
      %p62 = scmp.eq.s32.totalorder %s24, 0
      %p63 = por %p61, %p62
      %s64 = ssub.s32 %s26, %s33
      %s65 = ssub.s32 %s25, %s37
      %s66 = sor.u32 %s64, %s65
      %p67 = scmp.eq.s32.totalorder %s66, 0
      %s69 = sadd.s32 %s68, 1
      %s70 = scalar_select %p67, %s68, %s69
      %p73 = pneg %p67
      %p74 = scmp.eq.s32.totalorder %s18, 1
      %p75 = por %p73, %p74
      %p76 = scmp.ne.s32.totalorder %s68, %s71
      %p77 = scmp.eq.s32.totalorder %s18, 0
      %p78 = por %p76, %p77
      %p79 = scmp.ne.s32.totalorder %s68, %s71
      %p80 = scmp.eq.s32.totalorder %s23, 1
      %p81 = por %p79, %p80
      %p82 = scmp.ne.s32.totalorder %s71, %s72
      %p83 = scmp.eq.s32.totalorder %s23, 0
      %p84 = por %p82, %p83
      %p85 = scmp.ne.s32.totalorder %s71, %s72
      %p86 = scmp.eq.s32.totalorder %s24, 1
      %p87 = por %p85, %p86
      %p89 = scmp.ne.s32.totalorder %s72, %s88
      %p90 = scmp.eq.s32.totalorder %s24, 0
      %p91 = por %p89, %p90
      %s92 = ssub.s32 %s25, %s37
      %p93 = scmp.eq.s32.totalorder %s92, 0
      %s95 = sadd.s32 %s94, 1
      %s96 = scalar_select %p93, %s94, %s95
      %p99 = pneg %p93
      %p100 = scmp.eq.s32.totalorder %s18, 1
      %p101 = por %p99, %p100
      %p102 = scmp.ne.s32.totalorder %s94, %s97
      %p103 = scmp.eq.s32.totalorder %s18, 0
      %p104 = por %p102, %p103
      %p105 = scmp.ne.s32.totalorder %s94, %s97
      %p106 = scmp.eq.s32.totalorder %s23, 1
      %p107 = por %p105, %p106
      %p108 = scmp.ne.s32.totalorder %s97, %s98
      %p109 = scmp.eq.s32.totalorder %s23, 0
      %p110 = por %p108, %p109
      %p111 = scmp.ne.s32.totalorder %s97, %s98
      %p112 = scmp.eq.s32.totalorder %s24, 1
      %p113 = por %p111, %p112
      %p115 = scmp.ne.s32.totalorder %s98, %s114
      %p116 = scmp.eq.s32.totalorder %s24, 0
      %p117 = por %p115, %p116
      %s118 = ssub.s32 %s25, %s37
      %p119 = scmp.eq.s32.totalorder %s118, 0
      %s121 = sadd.s32 %s120, 1
      %s122 = scalar_select %p119, %s120, %s121
      %p125 = pneg %p119
      %p126 = scmp.eq.s32.totalorder %s18, 1
      %p127 = por %p125, %p126
      %p128 = scmp.ne.s32.totalorder %s120, %s123
      %p129 = scmp.eq.s32.totalorder %s18, 0
      %p130 = por %p128, %p129
      %p131 = scmp.ne.s32.totalorder %s120, %s123
      %p132 = scmp.eq.s32.totalorder %s23, 1
      %p133 = por %p131, %p132
      %p134 = scmp.ne.s32.totalorder %s123, %s124
      %p135 = scmp.eq.s32.totalorder %s23, 0
      %p136 = por %p134, %p135
      %p137 = scmp.ne.s32.totalorder %s123, %s124
      %p138 = scmp.eq.s32.totalorder %s24, 1
      %p139 = por %p137, %p138
      %p141 = scmp.ne.s32.totalorder %s124, %s140
      %p142 = scmp.eq.s32.totalorder %s24, 0
      %p143 = por %p141, %p142
      %s144 = ssub.s32 %s25, %s37
      %p145 = scmp.eq.s32.totalorder %s144, 0
      %s147 = sadd.s32 %s146, 1
      %s148 = scalar_select %p145, %s146, %s147
      %p151 = pneg %p145
      %p152 = scmp.eq.s32.totalorder %s18, 1
      %p153 = por %p151, %p152
      %p154 = scmp.ne.s32.totalorder %s146, %s149
      %p155 = scmp.eq.s32.totalorder %s18, 0
      %p156 = por %p154, %p155
      %p157 = scmp.ne.s32.totalorder %s146, %s149
      %p158 = scmp.eq.s32.totalorder %s23, 1
      %p159 = por %p157, %p158
      %p160 = scmp.ne.s32.totalorder %s149, %s150
      %p161 = scmp.eq.s32.totalorder %s23, 0
      %p162 = por %p160, %p161
      %p163 = scmp.ne.s32.totalorder %s149, %s150
      %p164 = scmp.eq.s32.totalorder %s24, 1
      %p165 = por %p163, %p164
      %p167 = scmp.ne.s32.totalorder %s150, %s166
      %p168 = scmp.eq.s32.totalorder %s24, 0
      %p169 = por %p167, %p168
      %s170 = ssub.s32 %s25, %s37
      %p171 = scmp.eq.s32.totalorder %s170, 0
      %s173 = sadd.s32 %s172, 1
      %s174 = scalar_select %p171, %s172, %s173
      %p177 = pneg %p171
      %p178 = scmp.eq.s32.totalorder %s18, 1
      %p179 = por %p177, %p178
      %p180 = scmp.ne.s32.totalorder %s172, %s175
      %p181 = scmp.eq.s32.totalorder %s18, 0
      %p182 = por %p180, %p181
      %p183 = scmp.ne.s32.totalorder %s172, %s175
      %p184 = scmp.eq.s32.totalorder %s23, 1
      %p185 = por %p183, %p184
      %p186 = scmp.ne.s32.totalorder %s175, %s176
      %p187 = scmp.eq.s32.totalorder %s23, 0
      %p188 = por %p186, %p187
      %p189 = scmp.ne.s32.totalorder %s175, %s176
      %p190 = scmp.eq.s32.totalorder %s24, 1
      %p191 = por %p189, %p190
      %p193 = scmp.ne.s32.totalorder %s176, %s192
      %p194 = scmp.eq.s32.totalorder %s24, 0
      %p195 = por %p193, %p194
      %p196 = scmp.le.s32.totalorder 1, %s18
      %p197 = scmp.lt.s32.totalorder %s18, 3
      %p198 = pnand %p196, %p197
      %p199 = pneg %p198
      // Predicated region
      $region9: #{tpu_custom_call.1} parent=5 // pred_check
        _
      $region10: #{tpu_custom_call.1} parent=5 // pred_check_branch
        %201 = sbr.rel (%p198) target = $region12
      $region11: #{tpu_custom_call.1} parent=5 // pred_region
        %s202 = ssub.s32 %s18, 1
        // Predicated region
        $region13: #{tpu_custom_call.1} parent=11 // pred_check
          %p203 = pneg %p110
        $region14: #{tpu_custom_call.1} parent=11 // pred_check_branch
          %205 = sbr.rel (%p203) target = $region16
        $region15: #{tpu_custom_call.1} parent=11 // pred_region
          %s206 = smul.u32 4, %s27
          %p207 = scmp.lt.s32.totalorder %s206, 3
          %s208 = scalar_select %p207, %s206, 3
          %s209 = scalar_lea.vmem %s2, %s208
          %s210 = smul.u32 4, %s27
        $region16: #{tpu_custom_call.1} parent=11 // pred_fallthru
          _
        // Predicated region
        $region17: #{tpu_custom_call.1} parent=11 // pred_check
          %p211 = pneg %p136
        $region18: #{tpu_custom_call.1} parent=11 // pred_check_branch
          %213 = sbr.rel (%p211) target = $region20
        $region19: #{tpu_custom_call.1} parent=11 // pred_region
          %s214 = smul.u32 4, %s27
          %p215 = scmp.lt.s32.totalorder %s214, 3
          %s216 = scalar_select %p215, %s214, 3
          %s217 = scalar_lea.vmem %s3, %s216
          %s218 = smul.u32 4, %s27
        $region20: #{tpu_custom_call.1} parent=11 // pred_fallthru
          _
        // Predicated region
        $region21: #{tpu_custom_call.1} parent=11 // pred_check
          %p219 = pneg %p162
        $region22: #{tpu_custom_call.1} parent=11 // pred_check_branch
          %221 = sbr.rel (%p219) target = $region24
        $region23: #{tpu_custom_call.1} parent=11 // pred_region
          %s222 = smul.u32 4, %s27
          %p223 = scmp.lt.s32.totalorder %s222, 3
          %s224 = scalar_select %p223, %s222, 3
          %s225 = scalar_lea.vmem %s4, %s224
          %s226 = smul.u32 4, %s27
        $region24: #{tpu_custom_call.1} parent=11 // pred_fallthru
          _
      $region12: #{tpu_custom_call.1} parent=5 // pred_fallthru
        _
      %p227 = scmp.lt.s32.totalorder %s18, 2
      // Predicated region
      $region25: #{tpu_custom_call.1} parent=5 // pred_check
        %p228 = pneg %p227
      $region26: #{tpu_custom_call.1} parent=5 // pred_check_branch
        %230 = sbr.rel (%p228) target = $region28
      $region27: #{tpu_custom_call.1} parent=5 // pred_region
        // Predicated region
        $region29: #{tpu_custom_call.1} parent=27 // pred_check
          %p231 = pneg %p50
        $region30: #{tpu_custom_call.1} parent=27 // pred_check_branch
          %233 = sbr.rel (%p231) target = $region32
        $region31: #{tpu_custom_call.1} parent=27 // pred_region
          %s234 = sand.u32 %s40, 1
          %s235 = scalar_lea.sflag [#allocation4], %s234
          %s236 = sand.u32 %s40, 1
          %s237 = smul.addr %s236, 12
          %s238 = scalar_lea.vmem [#allocation3], %s237
          %s239 = smul.u32 3, %s26
          %s241 = ssub.s32 192, 192
          %242 = vsyncadd %s235, %s241
          %s243 = smul.addr %s239, 64
          %s244 = scalar_lea.hbm %s0, %s243
          %s246 = sshll.u32 %s238, 4
          %s247 = int_to_ptr.vmem [resolvable:$true] %s246
          %249 = dma.hbm_to_vmem [thread:$0]  %s244, 192, %s247, %s235
        $region32: #{tpu_custom_call.1} parent=27 // pred_fallthru
          _
        // Predicated region
        $region33: #{tpu_custom_call.1} parent=27 // pred_check
          %p250 = pneg %p78
        $region34: #{tpu_custom_call.1} parent=27 // pred_check_branch
          %252 = sbr.rel (%p250) target = $region36
        $region35: #{tpu_custom_call.1} parent=27 // pred_region
          %s253 = sand.u32 %s68, 1
          %s254 = scalar_lea.sflag [#allocation7], %s253
          %s255 = sand.u32 %s68, 1
          %s256 = smul.addr %s255, 768
          %s257 = scalar_lea.vmem [#allocation6], %s256
          %s258 = smul.u32 48, %s26
          %s259 = smul.u32 4, %s25
          %s261 = ssub.s32 12288, 12288
          %262 = vsyncadd %s254, %s261
          %s263 = smul.addr %s258, 4
          %s264 = sadd.s32 %s259, %s263
          %s265 = smul.addr %s264, 64
          %s266 = scalar_lea.hbm %s1, %s265
          %s267 = sshll.u32 %s257, 4
          %s268 = int_to_ptr.vmem [resolvable:$true] %s267
          %273 = dma.hbm_to_vmem [thread:$0]  %s266, 12288, %s268, %s254, 256, 256, 16
        $region36: #{tpu_custom_call.1} parent=27 // pred_fallthru
          _
      $region28: #{tpu_custom_call.1} parent=5 // pred_fallthru
        _
      %p274 = scmp.le.s32.totalorder 1, %s18
      %p275 = scmp.lt.s32.totalorder %s18, 3
      %p276 = pnand %p274, %p275
      %p277 = pneg %p276
      // Predicated region
      $region37: #{tpu_custom_call.1} parent=5 // pred_check
        _
      $region38: #{tpu_custom_call.1} parent=5 // pred_check_branch
        %279 = sbr.rel (%p276) target = $region40
      $region39: #{tpu_custom_call.1} parent=5 // pred_region
        %s280 = ssub.s32 %s18, 1
        %s281 = sand.u32 %s43, 1
        %s282 = scalar_lea.sflag [#allocation4], %s281
        %s283 = sand.u32 %s43, 1
        %s284 = smul.addr %s283, 12
        %s285 = scalar_lea.vmem [#allocation3], %s284
        // Predicated region
        $region41: #{tpu_custom_call.1} parent=39 // pred_check
          %p286 = pneg %p56
        $region42: #{tpu_custom_call.1} parent=39 // pred_check_branch
          %288 = sbr.rel (%p286) target = $region44
        $region43: #{tpu_custom_call.1} parent=39 // pred_region
          %289 = dma.done %s282, 192
        $region44: #{tpu_custom_call.1} parent=39 // pred_fallthru
          _
        %s290 = sand.u32 %s71, 1
        %s291 = scalar_lea.sflag [#allocation7], %s290
        %s292 = sand.u32 %s71, 1
        %s293 = smul.addr %s292, 768
        %s294 = scalar_lea.vmem [#allocation6], %s293
        // Predicated region
        $region45: #{tpu_custom_call.1} parent=39 // pred_check
          %p295 = pneg %p84
        $region46: #{tpu_custom_call.1} parent=39 // pred_check_branch
          %297 = sbr.rel (%p295) target = $region48
        $region47: #{tpu_custom_call.1} parent=39 // pred_region
          %298 = dma.done %s291, 12288
        $region48: #{tpu_custom_call.1} parent=39 // pred_fallthru
          _
        %s299 = sand.u32 %s43, 1
        %s300 = scalar_lea.sflag [#allocation4], %s299
        %s301 = sand.u32 %s43, 1
        %s302 = smul.addr %s301, 12
        %s303 = scalar_lea.vmem [#allocation3], %s302
        %p304 = pneg %p56
        %p305 = pneg %p53
        %s306 = sand.u32 %s71, 1
        %s307 = scalar_lea.sflag [#allocation7], %s306
        %s308 = sand.u32 %s71, 1
        %s309 = smul.addr %s308, 768
        %s310 = scalar_lea.vmem [#allocation6], %s309
        %p311 = pneg %p84
        %p312 = pneg %p81
        %s313 = smul.u32 4, %s27
        %p314 = scmp.lt.s32.totalorder %s313, 3
        %s315 = scalar_select %p314, %s313, 3
        %s316 = scalar_lea.vmem %s2, %s315
        %p317 = pneg %p110
        %p318 = pneg %p107
        %s319 = smul.u32 4, %s27
        %p320 = scmp.lt.s32.totalorder %s319, 3
        %s321 = scalar_select %p320, %s319, 3
        %s322 = scalar_lea.vmem %s3, %s321
        %p323 = pneg %p136
        %p324 = pneg %p133
        %s325 = smul.u32 4, %s27
        %p326 = scmp.lt.s32.totalorder %s325, 3
        %s327 = scalar_select %p326, %s325, 3
        %s328 = scalar_lea.vmem %s4, %s327
        %p329 = pneg %p162
        %p330 = pneg %p159
        %p331 = pneg %p188
        %p332 = pneg %p185
        %s333 = smul.u32 3, %s28
        %s334 = smul.u32 48, %s28
        %s335 = smul.u32 4, %s27
        %s336 = smul.u32 4, %s27
        %p337 = scmp.lt.s32.totalorder %s336, 3
        %s338 = scalar_select %p337, %s336, 3
        %s339 = scalar_lea.vmem %s2, %s338
        %s340 = smul.u32 4, %s27
        %s341 = smul.u32 4, %s27
        %p342 = scmp.lt.s32.totalorder %s341, 3
        %s343 = scalar_select %p342, %s341, 3
        %s344 = scalar_lea.vmem %s3, %s343
        %s345 = smul.u32 4, %s27
        %s346 = smul.u32 4, %s27
        %p347 = scmp.lt.s32.totalorder %s346, 3
        %s348 = scalar_select %p347, %s346, 3
        %s349 = scalar_lea.vmem %s4, %s348
        %s350 = smul.u32 4, %s27
        %s351 = smul.u32 4, %s27
        %p353 = scmp.eq.s32.totalorder %s28, 0
        // Predicated region
        $region49: #{tpu_custom_call.1} parent=39 // pred_check
          %p354 = pneg %p353
        $region50: #{tpu_custom_call.1} parent=39 // pred_check_branch
          %356 = sbr.rel (%p354) target = $region52
        $region51: #{tpu_custom_call.1} parent=39 // pred_region
          %357 = vst [vmem:[#allocation2] sm:$0xff] 0.0
          %358 = vst [vmem:[#allocation2 + $0x8] sm:$0xff] 0.0
          %359 = vst [vmem:[#allocation2 + $0x10] sm:$0xff] 0.0
          %360 = vst [vmem:[#allocation2 + $0x18] sm:$0xff] 0.0
        $region52: #{tpu_custom_call.1} parent=39 // pred_fallthru
          _
        %v361 = vld [vmem:[#allocation2] sm:$0xff]
        %v362 = vld [vmem:[#allocation2 + $0x8] sm:$0xff]
        %v363 = vld [vmem:[#allocation2 + $0x10] sm:$0xff]
        %v364 = vld [vmem:[#allocation2 + $0x18] sm:$0xff]
        %v365 = vld [vmem:[%s285] sm:$0xff]
        %v366 = vld [vmem:[%s285 + $0x8] sm:$0xf]
        %v367 = vld [vmem:[%s294] sm:$0xff]
        %v368 = vld [vmem:[%s294 + $0x8] sm:$0xff]
        %v369 = vld [vmem:[%s294 + $0x10] sm:$0xff]
        %v370 = vld [vmem:[%s294 + $0x18] sm:$0xff]
        %v371 = vld [vmem:[%s294 + $0x20] sm:$0xff]
        %v372 = vld [vmem:[%s294 + $0x28] sm:$0xff]
        %v373 = vld [vmem:[%s294 + $0x30] sm:$0xff]
        %v374 = vld [vmem:[%s294 + $0x38] sm:$0xff]
        %v375 = vld [vmem:[%s294 + $0x40] sm:$0xff]
        %v376 = vld [vmem:[%s294 + $0x48] sm:$0xff]
        %v377 = vld [vmem:[%s294 + $0x50] sm:$0xff]
        %v378 = vld [vmem:[%s294 + $0x58] sm:$0xff]
        %v379 = vld [vmem:[%s294 + $0x60] sm:$0xff]
        %v380 = vld [vmem:[%s294 + $0x68] sm:$0xff]
        %v381 = vld [vmem:[%s294 + $0x70] sm:$0xff]
        %v382 = vld [vmem:[%s294 + $0x78] sm:$0xff]
        %v383 = vld [vmem:[%s294 + $0x80] sm:$0xff]
        %v384 = vld [vmem:[%s294 + $0x88] sm:$0xff]
        %v385 = vld [vmem:[%s294 + $0x90] sm:$0xff]
        %v386 = vld [vmem:[%s294 + $0x98] sm:$0xff]
        %v387 = vld [vmem:[%s294 + $0xa0] sm:$0xff]
        %v388 = vld [vmem:[%s294 + $0xa8] sm:$0xff]
        %v389 = vld [vmem:[%s294 + $0xb0] sm:$0xff]
        %v390 = vld [vmem:[%s294 + $0xb8] sm:$0xff]
        %v391 = vld [vmem:[%s294 + $0xc0] sm:$0xff]
        %v392 = vld [vmem:[%s294 + $0xc8] sm:$0xff]
        %v393 = vld [vmem:[%s294 + $0xd0] sm:$0xff]
        %v394 = vld [vmem:[%s294 + $0xd8] sm:$0xff]
        %v395 = vld [vmem:[%s294 + $0xe0] sm:$0xff]
        %v396 = vld [vmem:[%s294 + $0xe8] sm:$0xff]
        %v397 = vld [vmem:[%s294 + $0xf0] sm:$0xff]
        %v398 = vld [vmem:[%s294 + $0xf8] sm:$0xff]
        %v399 = vld [vmem:[%s294 + $0x100] sm:$0xff]
        %v400 = vld [vmem:[%s294 + $0x108] sm:$0xff]
        %v401 = vld [vmem:[%s294 + $0x110] sm:$0xff]
        %v402 = vld [vmem:[%s294 + $0x118] sm:$0xff]
        %v403 = vld [vmem:[%s294 + $0x120] sm:$0xff]
        %v404 = vld [vmem:[%s294 + $0x128] sm:$0xff]
        %v405 = vld [vmem:[%s294 + $0x130] sm:$0xff]
        %v406 = vld [vmem:[%s294 + $0x138] sm:$0xff]
        %v407 = vld [vmem:[%s294 + $0x140] sm:$0xff]
        %v408 = vld [vmem:[%s294 + $0x148] sm:$0xff]
        %v409 = vld [vmem:[%s294 + $0x150] sm:$0xff]
        %v410 = vld [vmem:[%s294 + $0x158] sm:$0xff]
        %v411 = vld [vmem:[%s294 + $0x160] sm:$0xff]
        %v412 = vld [vmem:[%s294 + $0x168] sm:$0xff]
        %v413 = vld [vmem:[%s294 + $0x170] sm:$0xff]
        %v414 = vld [vmem:[%s294 + $0x178] sm:$0xff]
        %v415 = vld [vmem:[%s294 + $0x180] sm:$0xff]
        %v416 = vld [vmem:[%s294 + $0x188] sm:$0xff]
        %v417 = vld [vmem:[%s294 + $0x190] sm:$0xff]
        %v418 = vld [vmem:[%s294 + $0x198] sm:$0xff]
        %v419 = vld [vmem:[%s294 + $0x1a0] sm:$0xff]
        %v420 = vld [vmem:[%s294 + $0x1a8] sm:$0xff]
        %v421 = vld [vmem:[%s294 + $0x1b0] sm:$0xff]
        %v422 = vld [vmem:[%s294 + $0x1b8] sm:$0xff]
        %v423 = vld [vmem:[%s294 + $0x1c0] sm:$0xff]
        %v424 = vld [vmem:[%s294 + $0x1c8] sm:$0xff]
        %v425 = vld [vmem:[%s294 + $0x1d0] sm:$0xff]
        %v426 = vld [vmem:[%s294 + $0x1d8] sm:$0xff]
        %v427 = vld [vmem:[%s294 + $0x1e0] sm:$0xff]
        %v428 = vld [vmem:[%s294 + $0x1e8] sm:$0xff]
        %v429 = vld [vmem:[%s294 + $0x1f0] sm:$0xff]
        %v430 = vld [vmem:[%s294 + $0x1f8] sm:$0xff]
        %v431 = vld [vmem:[%s294 + $0x200] sm:$0xff]
        %v432 = vld [vmem:[%s294 + $0x208] sm:$0xff]
        %v433 = vld [vmem:[%s294 + $0x210] sm:$0xff]
        %v434 = vld [vmem:[%s294 + $0x218] sm:$0xff]
        %v435 = vld [vmem:[%s294 + $0x220] sm:$0xff]
        %v436 = vld [vmem:[%s294 + $0x228] sm:$0xff]
        %v437 = vld [vmem:[%s294 + $0x230] sm:$0xff]
        %v438 = vld [vmem:[%s294 + $0x238] sm:$0xff]
        %v439 = vld [vmem:[%s294 + $0x240] sm:$0xff]
        %v440 = vld [vmem:[%s294 + $0x248] sm:$0xff]
        %v441 = vld [vmem:[%s294 + $0x250] sm:$0xff]
        %v442 = vld [vmem:[%s294 + $0x258] sm:$0xff]
        %v443 = vld [vmem:[%s294 + $0x260] sm:$0xff]
        %v444 = vld [vmem:[%s294 + $0x268] sm:$0xff]
        %v445 = vld [vmem:[%s294 + $0x270] sm:$0xff]
        %v446 = vld [vmem:[%s294 + $0x278] sm:$0xff]
        %v447 = vld [vmem:[%s294 + $0x280] sm:$0xff]
        %v448 = vld [vmem:[%s294 + $0x288] sm:$0xff]
        %v449 = vld [vmem:[%s294 + $0x290] sm:$0xff]
        %v450 = vld [vmem:[%s294 + $0x298] sm:$0xff]
        %v451 = vld [vmem:[%s294 + $0x2a0] sm:$0xff]
        %v452 = vld [vmem:[%s294 + $0x2a8] sm:$0xff]
        %v453 = vld [vmem:[%s294 + $0x2b0] sm:$0xff]
        %v454 = vld [vmem:[%s294 + $0x2b8] sm:$0xff]
        %v455 = vld [vmem:[%s294 + $0x2c0] sm:$0xff]
        %v456 = vld [vmem:[%s294 + $0x2c8] sm:$0xff]
        %v457 = vld [vmem:[%s294 + $0x2d0] sm:$0xff]
        %v458 = vld [vmem:[%s294 + $0x2d8] sm:$0xff]
        %v459 = vld [vmem:[%s294 + $0x2e0] sm:$0xff]
        %v460 = vld [vmem:[%s294 + $0x2e8] sm:$0xff]
        %v461 = vld [vmem:[%s294 + $0x2f0] sm:$0xff]
        %v462 = vld [vmem:[%s294 + $0x2f8] sm:$0xff]
        %v465 = vunpack.c.l.b16 %v365
        %v466 = vunpack.c.h.b16 %v365
        %v467 = vunpack.c.l.b16 %v366
        %v468 = vpack.c.b16 %v465, %v465
        %v469 = vpack.c.b16 %v466, %v466
        %v470 = vpack.c.b16 %v467, %v467
        %v570 = vunpack.c.l.b16 %v367
        %v571 = vunpack.c.h.b16 %v367
        %v572 = vunpack.c.l.b16 %v368
        %v573 = vunpack.c.h.b16 %v368
        %v574 = vunpack.c.l.b16 %v369
        %v575 = vunpack.c.h.b16 %v369
        %v576 = vunpack.c.l.b16 %v370
        %v577 = vunpack.c.h.b16 %v370
        %v578 = vunpack.c.l.b16 %v371
        %v579 = vunpack.c.h.b16 %v371
        %v580 = vunpack.c.l.b16 %v372
        %v581 = vunpack.c.h.b16 %v372
        %v582 = vunpack.c.l.b16 %v373
        %v583 = vunpack.c.h.b16 %v373
        %v584 = vunpack.c.l.b16 %v374
        %v585 = vunpack.c.h.b16 %v374
        %v586 = vunpack.c.l.b16 %v375
        %v587 = vunpack.c.h.b16 %v375
        %v588 = vunpack.c.l.b16 %v376
        %v589 = vunpack.c.h.b16 %v376
        %v590 = vunpack.c.l.b16 %v377
        %v591 = vunpack.c.h.b16 %v377
        %v592 = vunpack.c.l.b16 %v378
        %v593 = vunpack.c.h.b16 %v378
        %v594 = vunpack.c.l.b16 %v379
        %v595 = vunpack.c.h.b16 %v379
        %v596 = vunpack.c.l.b16 %v380
        %v597 = vunpack.c.h.b16 %v380
        %v598 = vunpack.c.l.b16 %v381
        %v599 = vunpack.c.h.b16 %v381
        %v600 = vunpack.c.l.b16 %v382
        %v601 = vunpack.c.h.b16 %v382
        %v602 = vunpack.c.l.b16 %v383
        %v603 = vunpack.c.h.b16 %v383
        %v604 = vunpack.c.l.b16 %v384
        %v605 = vunpack.c.h.b16 %v384
        %v606 = vunpack.c.l.b16 %v385
        %v607 = vunpack.c.h.b16 %v385
        %v608 = vunpack.c.l.b16 %v386
        %v609 = vunpack.c.h.b16 %v386
        %v610 = vunpack.c.l.b16 %v387
        %v611 = vunpack.c.h.b16 %v387
        %v612 = vunpack.c.l.b16 %v388
        %v613 = vunpack.c.h.b16 %v388
        %v614 = vunpack.c.l.b16 %v389
        %v615 = vunpack.c.h.b16 %v389
        %v616 = vunpack.c.l.b16 %v390
        %v617 = vunpack.c.h.b16 %v390
        %v618 = vunpack.c.l.b16 %v391
        %v619 = vunpack.c.h.b16 %v391
        %v620 = vunpack.c.l.b16 %v392
        %v621 = vunpack.c.h.b16 %v392
        %v622 = vunpack.c.l.b16 %v393
        %v623 = vunpack.c.h.b16 %v393
        %v624 = vunpack.c.l.b16 %v394
        %v625 = vunpack.c.h.b16 %v394
        %v626 = vunpack.c.l.b16 %v395
        %v627 = vunpack.c.h.b16 %v395
        %v628 = vunpack.c.l.b16 %v396
        %v629 = vunpack.c.h.b16 %v396
        %v630 = vunpack.c.l.b16 %v397
        %v631 = vunpack.c.h.b16 %v397
        %v632 = vunpack.c.l.b16 %v398
        %v633 = vunpack.c.h.b16 %v398
        %v634 = vunpack.c.l.b16 %v399
        %v635 = vunpack.c.h.b16 %v399
        %v636 = vunpack.c.l.b16 %v400
        %v637 = vunpack.c.h.b16 %v400
        %v638 = vunpack.c.l.b16 %v401
        %v639 = vunpack.c.h.b16 %v401
        %v640 = vunpack.c.l.b16 %v402
        %v641 = vunpack.c.h.b16 %v402
        %v642 = vunpack.c.l.b16 %v403
        %v643 = vunpack.c.h.b16 %v403
        %v644 = vunpack.c.l.b16 %v404
        %v645 = vunpack.c.h.b16 %v404
        %v646 = vunpack.c.l.b16 %v405
        %v647 = vunpack.c.h.b16 %v405
        %v648 = vunpack.c.l.b16 %v406
        %v649 = vunpack.c.h.b16 %v406
        %v650 = vunpack.c.l.b16 %v407
        %v651 = vunpack.c.h.b16 %v407
        %v652 = vunpack.c.l.b16 %v408
        %v653 = vunpack.c.h.b16 %v408
        %v654 = vunpack.c.l.b16 %v409
        %v655 = vunpack.c.h.b16 %v409
        %v656 = vunpack.c.l.b16 %v410
        %v657 = vunpack.c.h.b16 %v410
        %v658 = vunpack.c.l.b16 %v411
        %v659 = vunpack.c.h.b16 %v411
        %v660 = vunpack.c.l.b16 %v412
        %v661 = vunpack.c.h.b16 %v412
        %v662 = vunpack.c.l.b16 %v413
        %v663 = vunpack.c.h.b16 %v413
        %v664 = vunpack.c.l.b16 %v414
        %v665 = vunpack.c.h.b16 %v414
        %v666 = vunpack.c.l.b16 %v415
        %v667 = vunpack.c.h.b16 %v415
        %v668 = vunpack.c.l.b16 %v416
        %v669 = vunpack.c.h.b16 %v416
        %v670 = vunpack.c.l.b16 %v417
        %v671 = vunpack.c.h.b16 %v417
        %v672 = vunpack.c.l.b16 %v418
        %v673 = vunpack.c.h.b16 %v418
        %v674 = vunpack.c.l.b16 %v419
        %v675 = vunpack.c.h.b16 %v419
        %v676 = vunpack.c.l.b16 %v420
        %v677 = vunpack.c.h.b16 %v420
        %v678 = vunpack.c.l.b16 %v421
        %v679 = vunpack.c.h.b16 %v421
        %v680 = vunpack.c.l.b16 %v422
        %v681 = vunpack.c.h.b16 %v422
        %v682 = vunpack.c.l.b16 %v423
        %v683 = vunpack.c.h.b16 %v423
        %v684 = vunpack.c.l.b16 %v424
        %v685 = vunpack.c.h.b16 %v424
        %v686 = vunpack.c.l.b16 %v425
        %v687 = vunpack.c.h.b16 %v425
        %v688 = vunpack.c.l.b16 %v426
        %v689 = vunpack.c.h.b16 %v426
        %v690 = vunpack.c.l.b16 %v427
        %v691 = vunpack.c.h.b16 %v427
        %v692 = vunpack.c.l.b16 %v428
        %v693 = vunpack.c.h.b16 %v428
        %v694 = vunpack.c.l.b16 %v429
        %v695 = vunpack.c.h.b16 %v429
        %v696 = vunpack.c.l.b16 %v430
        %v697 = vunpack.c.h.b16 %v430
        %v698 = vunpack.c.l.b16 %v431
        %v699 = vunpack.c.h.b16 %v431
        %v700 = vunpack.c.l.b16 %v432
        %v701 = vunpack.c.h.b16 %v432
        %v702 = vunpack.c.l.b16 %v433
        %v703 = vunpack.c.h.b16 %v433
        %v704 = vunpack.c.l.b16 %v434
        %v705 = vunpack.c.h.b16 %v434
        %v706 = vunpack.c.l.b16 %v435
        %v707 = vunpack.c.h.b16 %v435
        %v708 = vunpack.c.l.b16 %v436
        %v709 = vunpack.c.h.b16 %v436
        %v710 = vunpack.c.l.b16 %v437
        %v711 = vunpack.c.h.b16 %v437
        %v712 = vunpack.c.l.b16 %v438
        %v713 = vunpack.c.h.b16 %v438
        %v714 = vunpack.c.l.b16 %v439
        %v715 = vunpack.c.h.b16 %v439
        %v716 = vunpack.c.l.b16 %v440
        %v717 = vunpack.c.h.b16 %v440
        %v718 = vunpack.c.l.b16 %v441
        %v719 = vunpack.c.h.b16 %v441
        %v720 = vunpack.c.l.b16 %v442
        %v721 = vunpack.c.h.b16 %v442
        %v722 = vunpack.c.l.b16 %v443
        %v723 = vunpack.c.h.b16 %v443
        %v724 = vunpack.c.l.b16 %v444
        %v725 = vunpack.c.h.b16 %v444
        %v726 = vunpack.c.l.b16 %v445
        %v727 = vunpack.c.h.b16 %v445
        %v728 = vunpack.c.l.b16 %v446
        %v729 = vunpack.c.h.b16 %v446
        %v730 = vunpack.c.l.b16 %v447
        %v731 = vunpack.c.h.b16 %v447
        %v732 = vunpack.c.l.b16 %v448
        %v733 = vunpack.c.h.b16 %v448
        %v734 = vunpack.c.l.b16 %v449
        %v735 = vunpack.c.h.b16 %v449
        %v736 = vunpack.c.l.b16 %v450
        %v737 = vunpack.c.h.b16 %v450
        %v738 = vunpack.c.l.b16 %v451
        %v739 = vunpack.c.h.b16 %v451
        %v740 = vunpack.c.l.b16 %v452
        %v741 = vunpack.c.h.b16 %v452
        %v742 = vunpack.c.l.b16 %v453
        %v743 = vunpack.c.h.b16 %v453
        %v744 = vunpack.c.l.b16 %v454
        %v745 = vunpack.c.h.b16 %v454
        %v746 = vunpack.c.l.b16 %v455
        %v747 = vunpack.c.h.b16 %v455
        %v748 = vunpack.c.l.b16 %v456
        %v749 = vunpack.c.h.b16 %v456
        %v750 = vunpack.c.l.b16 %v457
        %v751 = vunpack.c.h.b16 %v457
        %v752 = vunpack.c.l.b16 %v458
        %v753 = vunpack.c.h.b16 %v458
        %v754 = vunpack.c.l.b16 %v459
        %v755 = vunpack.c.h.b16 %v459
        %v756 = vunpack.c.l.b16 %v460
        %v757 = vunpack.c.h.b16 %v460
        %v758 = vunpack.c.l.b16 %v461
        %v759 = vunpack.c.h.b16 %v461
        %v760 = vunpack.c.l.b16 %v462
        %v761 = vunpack.c.h.b16 %v462
        %v762 = vpack.c.b16 %v574, %v570
        %v763 = vpack.c.b16 %v575, %v571
        %v764 = vpack.c.b16 %v576, %v572
        %v765 = vpack.c.b16 %v577, %v573
        %v766 = vpack.c.b16 %v582, %v578
        %v767 = vpack.c.b16 %v583, %v579
        %v768 = vpack.c.b16 %v584, %v580
        %v769 = vpack.c.b16 %v585, %v581
        %v770 = vpack.c.b16 %v590, %v586
        %v771 = vpack.c.b16 %v591, %v587
        %v772 = vpack.c.b16 %v592, %v588
        %v773 = vpack.c.b16 %v593, %v589
        %v774 = vpack.c.b16 %v598, %v594
        %v775 = vpack.c.b16 %v599, %v595
        %v776 = vpack.c.b16 %v600, %v596
        %v777 = vpack.c.b16 %v601, %v597
        %v778 = vpack.c.b16 %v606, %v602
        %v779 = vpack.c.b16 %v607, %v603
        %v780 = vpack.c.b16 %v608, %v604
        %v781 = vpack.c.b16 %v609, %v605
        %v782 = vpack.c.b16 %v614, %v610
        %v783 = vpack.c.b16 %v615, %v611
        %v784 = vpack.c.b16 %v616, %v612
        %v785 = vpack.c.b16 %v617, %v613
        %v786 = vpack.c.b16 %v622, %v618
        %v787 = vpack.c.b16 %v623, %v619
        %v788 = vpack.c.b16 %v624, %v620
        %v789 = vpack.c.b16 %v625, %v621
        %v790 = vpack.c.b16 %v630, %v626
        %v791 = vpack.c.b16 %v631, %v627
        %v792 = vpack.c.b16 %v632, %v628
        %v793 = vpack.c.b16 %v633, %v629
        %v794 = vpack.c.b16 %v638, %v634
        %v795 = vpack.c.b16 %v639, %v635
        %v796 = vpack.c.b16 %v640, %v636
        %v797 = vpack.c.b16 %v641, %v637
        %v798 = vpack.c.b16 %v646, %v642
        %v799 = vpack.c.b16 %v647, %v643
        %v800 = vpack.c.b16 %v648, %v644
        %v801 = vpack.c.b16 %v649, %v645
        %v802 = vpack.c.b16 %v654, %v650
        %v803 = vpack.c.b16 %v655, %v651
        %v804 = vpack.c.b16 %v656, %v652
        %v805 = vpack.c.b16 %v657, %v653
        %v806 = vpack.c.b16 %v662, %v658
        %v807 = vpack.c.b16 %v663, %v659
        %v808 = vpack.c.b16 %v664, %v660
        %v809 = vpack.c.b16 %v665, %v661
        %v810 = vpack.c.b16 %v670, %v666
        %v811 = vpack.c.b16 %v671, %v667
        %v812 = vpack.c.b16 %v672, %v668
        %v813 = vpack.c.b16 %v673, %v669
        %v814 = vpack.c.b16 %v678, %v674
        %v815 = vpack.c.b16 %v679, %v675
        %v816 = vpack.c.b16 %v680, %v676
        %v817 = vpack.c.b16 %v681, %v677
        %v818 = vpack.c.b16 %v686, %v682
        %v819 = vpack.c.b16 %v687, %v683
        %v820 = vpack.c.b16 %v688, %v684
        %v821 = vpack.c.b16 %v689, %v685
        %v822 = vpack.c.b16 %v694, %v690
        %v823 = vpack.c.b16 %v695, %v691
        %v824 = vpack.c.b16 %v696, %v692
        %v825 = vpack.c.b16 %v697, %v693
        %v826 = vpack.c.b16 %v702, %v698
        %v827 = vpack.c.b16 %v703, %v699
        %v828 = vpack.c.b16 %v704, %v700
        %v829 = vpack.c.b16 %v705, %v701
        %v830 = vpack.c.b16 %v710, %v706
        %v831 = vpack.c.b16 %v711, %v707
        %v832 = vpack.c.b16 %v712, %v708
        %v833 = vpack.c.b16 %v713, %v709
        %v834 = vpack.c.b16 %v718, %v714
        %v835 = vpack.c.b16 %v719, %v715
        %v836 = vpack.c.b16 %v720, %v716
        %v837 = vpack.c.b16 %v721, %v717
        %v838 = vpack.c.b16 %v726, %v722
        %v839 = vpack.c.b16 %v727, %v723
        %v840 = vpack.c.b16 %v728, %v724
        %v841 = vpack.c.b16 %v729, %v725
        %v842 = vpack.c.b16 %v734, %v730
        %v843 = vpack.c.b16 %v735, %v731
        %v844 = vpack.c.b16 %v736, %v732
        %v845 = vpack.c.b16 %v737, %v733
        %v846 = vpack.c.b16 %v742, %v738
        %v847 = vpack.c.b16 %v743, %v739
        %v848 = vpack.c.b16 %v744, %v740
        %v849 = vpack.c.b16 %v745, %v741
        %v850 = vpack.c.b16 %v750, %v746
        %v851 = vpack.c.b16 %v751, %v747
        %v852 = vpack.c.b16 %v752, %v748
        %v853 = vpack.c.b16 %v753, %v749
        %v854 = vpack.c.b16 %v758, %v754
        %v855 = vpack.c.b16 %v759, %v755
        %v856 = vpack.c.b16 %v760, %v756
        %v857 = vpack.c.b16 %v761, %v757
        %954 = vmatprep.subr.bf16.mxu0 %v763
        %955 = vmatpush1.bf16.msra.mxu0 %v762
        %956 = vmatprep.subr.bf16.mxu0 %v767
        %957 = vmatpush1.bf16.msra.mxu0 %v766
        %958 = vmatprep.subr.bf16.mxu0 %v771
        %959 = vmatpush1.bf16.msra.mxu0 %v770
        %960 = vmatprep.subr.bf16.mxu0 %v775
        %961 = vmatpush1.bf16.msra.mxu0 %v774
        %962 = vmatprep.subr.bf16.mxu0 %v779
        %963 = vmatpush1.bf16.msra.mxu0 %v778
        %964 = vmatprep.subr.bf16.mxu0 %v783
        %965 = vmatpush1.bf16.msra.mxu0 %v782
        %966 = vmatprep.subr.bf16.mxu0 %v787
        %967 = vmatpush1.bf16.msra.mxu0 %v786
        %968 = vmatprep.subr.bf16.mxu0 %v791
        %969 = vmatpush1.bf16.msra.mxu0 %v790
        %970 = vmatprep.subr.bf16.mxu0 %v795
        %971 = vmatpush1.bf16.msra.mxu0 %v794
        %972 = vmatprep.subr.bf16.mxu0 %v799
        %973 = vmatpush1.bf16.msra.mxu0 %v798
        %974 = vmatprep.subr.bf16.mxu0 %v803
        %975 = vmatpush1.bf16.msra.mxu0 %v802
        %976 = vmatprep.subr.bf16.mxu0 %v807
        %977 = vmatpush1.bf16.msra.mxu0 %v806
        %978 = vmatprep.subr.bf16.mxu0 %v811
        %979 = vmatpush1.bf16.msra.mxu0 %v810
        %980 = vmatprep.subr.bf16.mxu0 %v815
        %981 = vmatpush1.bf16.msra.mxu0 %v814
        %982 = vmatprep.subr.bf16.mxu0 %v819
        %983 = vmatpush1.bf16.msra.mxu0 %v818
        %984 = vmatprep.subr.bf16.mxu0 %v823
        %985 = vmatpush1.bf16.msra.mxu0 %v822
        %986 = vmatprep.mubr.bf16.mxu0 %v469
        %987 = vmatmul.mubr.bf16.gmra.mrb[0].mxu0 %v468
        %v988 = vpop.f32.mrb[0].mxu0
        %v989 = vadd.f32 0.0, %v988
        %v990 = vpop.f32.mrb[0].mxu0
        %v991 = vadd.f32 0.0, %v990
        %v992 = vpop.f32.mrb[0].mxu0
        %v993 = vpop.f32.mrb[0].mxu0
        %994 = vdwg.mxu0
        %995 = vmatprep.subr.bf16.mxu0 %v827
        %996 = vmatpush1.bf16.msra.mxu0 %v826
        %997 = vmatprep.subr.bf16.mxu0 %v831
        %998 = vmatpush1.bf16.msra.mxu0 %v830
        %999 = vmatprep.subr.bf16.mxu0 %v835
        %1000 = vmatpush1.bf16.msra.mxu0 %v834
        %1001 = vmatprep.subr.bf16.mxu0 %v839
        %1002 = vmatpush1.bf16.msra.mxu0 %v838
        %1003 = vmatprep.subr.bf16.mxu0 %v843
        %1004 = vmatpush1.bf16.msra.mxu0 %v842
        %1005 = vmatprep.subr.bf16.mxu0 %v847
        %1006 = vmatpush1.bf16.msra.mxu0 %v846
        %1007 = vmatprep.subr.bf16.mxu0 %v851
        %1008 = vmatpush1.bf16.msra.mxu0 %v850
        %1009 = vmatprep.subr.bf16.mxu0 %v855
        %1010 = vmatpush1.bf16.msra.mxu0 %v854
        %1011 = vmatprep.subr.bf16.mxu0 0
        %1012 = vmatpush1.bf16.msra.mxu0 0
        %1013 = vmatprep.subr.bf16.mxu0 0
        %1014 = vmatpush1.bf16.msra.mxu0 0
        %1015 = vmatprep.subr.bf16.mxu0 0
        %1016 = vmatpush1.bf16.msra.mxu0 0
        %1017 = vmatprep.subr.bf16.mxu0 0
        %1018 = vmatpush1.bf16.msra.mxu0 0
        %1019 = vmatprep.subr.bf16.mxu0 0
        %1020 = vmatpush1.bf16.msra.mxu0 0
        %1021 = vmatprep.subr.bf16.mxu0 0
        %1022 = vmatpush1.bf16.msra.mxu0 0
        %1023 = vmatprep.subr.bf16.mxu0 0
        %1024 = vmatpush1.bf16.msra.mxu0 0
        %1025 = vmatprep.subr.bf16.mxu0 0
        %1026 = vmatpush1.bf16.msra.mxu0 0
        %1027 = vmatprep.mubr.bf16.mxu0 0
        %1028 = vmatmul.mubr.bf16.gmra.mrb[0].mxu0 %v470
        %v1029 = vpop.f32.mrb[0].mxu0
        %v1030 = vadd.f32 %v989, %v1029
        %v1031 = vpop.f32.mrb[0].mxu0
        %v1032 = vadd.f32 %v991, %v1031
        %v1033 = vpop.f32.mrb[0].mxu0
        %v1034 = vpop.f32.mrb[0].mxu0
        %1035 = vdwg.mxu0
        %1036 = vmatprep.subr.bf16.mxu0 %v765
        %1037 = vmatpush1.bf16.msra.mxu0 %v764
        %1038 = vmatprep.subr.bf16.mxu0 %v769
        %1039 = vmatpush1.bf16.msra.mxu0 %v768
        %1040 = vmatprep.subr.bf16.mxu0 %v773
        %1041 = vmatpush1.bf16.msra.mxu0 %v772
        %1042 = vmatprep.subr.bf16.mxu0 %v777
        %1043 = vmatpush1.bf16.msra.mxu0 %v776
        %1044 = vmatprep.subr.bf16.mxu0 %v781
        %1045 = vmatpush1.bf16.msra.mxu0 %v780
        %1046 = vmatprep.subr.bf16.mxu0 %v785
        %1047 = vmatpush1.bf16.msra.mxu0 %v784
        %1048 = vmatprep.subr.bf16.mxu0 %v789
        %1049 = vmatpush1.bf16.msra.mxu0 %v788
        %1050 = vmatprep.subr.bf16.mxu0 %v793
        %1051 = vmatpush1.bf16.msra.mxu0 %v792
        %1052 = vmatprep.subr.bf16.mxu0 %v797
        %1053 = vmatpush1.bf16.msra.mxu0 %v796
        %1054 = vmatprep.subr.bf16.mxu0 %v801
        %1055 = vmatpush1.bf16.msra.mxu0 %v800
        %1056 = vmatprep.subr.bf16.mxu0 %v805
        %1057 = vmatpush1.bf16.msra.mxu0 %v804
        %1058 = vmatprep.subr.bf16.mxu0 %v809
        %1059 = vmatpush1.bf16.msra.mxu0 %v808
        %1060 = vmatprep.subr.bf16.mxu0 %v813
        %1061 = vmatpush1.bf16.msra.mxu0 %v812
        %1062 = vmatprep.subr.bf16.mxu0 %v817
        %1063 = vmatpush1.bf16.msra.mxu0 %v816
        %1064 = vmatprep.subr.bf16.mxu0 %v821
        %1065 = vmatpush1.bf16.msra.mxu0 %v820
        %1066 = vmatprep.subr.bf16.mxu0 %v825
        %1067 = vmatpush1.bf16.msra.mxu0 %v824
        %1068 = vmatprep.mubr.bf16.mxu0 %v469
        %1069 = vmatmul.mubr.bf16.gmra.mrb[0].mxu0 %v468
        %v1070 = vpop.f32.mrb[0].mxu0
        %v1071 = vadd.f32 0.0, %v1070
        %v1072 = vpop.f32.mrb[0].mxu0
        %v1073 = vadd.f32 0.0, %v1072
        %v1074 = vpop.f32.mrb[0].mxu0
        %v1075 = vpop.f32.mrb[0].mxu0
        %1076 = vdwg.mxu0
        %1077 = vmatprep.subr.bf16.mxu0 %v829
        %1078 = vmatpush1.bf16.msra.mxu0 %v828
        %1079 = vmatprep.subr.bf16.mxu0 %v833
        %1080 = vmatpush1.bf16.msra.mxu0 %v832
        %1081 = vmatprep.subr.bf16.mxu0 %v837
        %1082 = vmatpush1.bf16.msra.mxu0 %v836
        %1083 = vmatprep.subr.bf16.mxu0 %v841
        %1084 = vmatpush1.bf16.msra.mxu0 %v840
        %1085 = vmatprep.subr.bf16.mxu0 %v845
        %1086 = vmatpush1.bf16.msra.mxu0 %v844
        %1087 = vmatprep.subr.bf16.mxu0 %v849
        %1088 = vmatpush1.bf16.msra.mxu0 %v848
        %1089 = vmatprep.subr.bf16.mxu0 %v853
        %1090 = vmatpush1.bf16.msra.mxu0 %v852
        %1091 = vmatprep.subr.bf16.mxu0 %v857
        %1092 = vmatpush1.bf16.msra.mxu0 %v856
        %1093 = vmatprep.subr.bf16.mxu0 0
        %1094 = vmatpush1.bf16.msra.mxu0 0
        %1095 = vmatprep.subr.bf16.mxu0 0
        %1096 = vmatpush1.bf16.msra.mxu0 0
        %1097 = vmatprep.subr.bf16.mxu0 0
        %1098 = vmatpush1.bf16.msra.mxu0 0
        %1099 = vmatprep.subr.bf16.mxu0 0
        %1100 = vmatpush1.bf16.msra.mxu0 0
        %1101 = vmatprep.subr.bf16.mxu0 0
        %1102 = vmatpush1.bf16.msra.mxu0 0
        %1103 = vmatprep.subr.bf16.mxu0 0
        %1104 = vmatpush1.bf16.msra.mxu0 0
        %1105 = vmatprep.subr.bf16.mxu0 0
        %1106 = vmatpush1.bf16.msra.mxu0 0
        %1107 = vmatprep.subr.bf16.mxu0 0
        %1108 = vmatpush1.bf16.msra.mxu0 0
        %1109 = vmatprep.mubr.bf16.mxu0 0
        %1110 = vmatmul.mubr.bf16.gmra.mrb[0].mxu0 %v470
        %v1111 = vpop.f32.mrb[0].mxu0
        %v1112 = vadd.f32 %v1071, %v1111
        %v1113 = vpop.f32.mrb[0].mxu0
        %v1114 = vadd.f32 %v1073, %v1113
        %v1115 = vpop.f32.mrb[0].mxu0
        %v1116 = vpop.f32.mrb[0].mxu0
        %1117 = vdwg.mxu0
        %v1118 = vadd.f32 %v361, %v1030
        %v1119 = vadd.f32 %v362, %v1032
        %v1120 = vadd.f32 %v363, %v1112
        %v1121 = vadd.f32 %v364, %v1114
        %1122 = vst [vmem:[#allocation2] sm:$0xff] %v1118
        %1123 = vst [vmem:[#allocation2 + $0x8] sm:$0xff] %v1119
        %1124 = vst [vmem:[#allocation2 + $0x10] sm:$0xff] %v1120
        %1125 = vst [vmem:[#allocation2 + $0x18] sm:$0xff] %v1121
        %p1126 = scmp.eq.s32.totalorder %s28, 1
        // Predicated region
        $region53: #{tpu_custom_call.1} parent=39 // pred_check
          %p1127 = pneg %p1126
        $region54: #{tpu_custom_call.1} parent=39 // pred_check_branch
          %1129 = sbr.rel (%p1127) target = $region56
        $region55: #{tpu_custom_call.1} parent=39 // pred_region
          %v1130 = vld [vmem:[#allocation2] sm:$0xff]
          %v1131 = vld [vmem:[#allocation2 + $0x8] sm:$0xff]
          %v1132 = vld [vmem:[#allocation2 + $0x10] sm:$0xff]
          %v1133 = vld [vmem:[#allocation2 + $0x18] sm:$0xff]
          %v1134 = vld [vmem:[%s339] sm:$0xf]
          %v1136 = vlaneseq
          %v1137 = vshrl.u32 %v1136, 7
          %v1138 = vsub.s32 0, %v1137
          %v1139 = vrot.slane %v1134, %v1138
          %v1140 = vlaneseq
          %v1141 = vshrl.u32 %v1140, 7
          %v1142 = vsub.s32 1, %v1141
          %v1143 = vrot.slane %v1134, %v1142
          %v1144 = vlaneseq
          %v1145 = vshrl.u32 %v1144, 7
          %v1146 = vsub.s32 2, %v1145
          %v1147 = vrot.slane %v1134, %v1146
          %v1148 = vlaneseq
          %v1149 = vshrl.u32 %v1148, 7
          %v1150 = vsub.s32 3, %v1149
          %v1151 = vrot.slane %v1134, %v1150
          %v1156 = vadd.f32 %v1130, %v1139
          %v1157 = vadd.f32 %v1131, %v1143
          %v1158 = vadd.f32 %v1132, %v1147
          %v1159 = vadd.f32 %v1133, %v1151
          %v1160 = vpack.c.bf16 %v1156, %v1156
          %v1161 = vpack.c.bf16 %v1157, %v1157
          %v1162 = vpack.c.bf16 %v1158, %v1158
          %v1163 = vpack.c.bf16 %v1159, %v1159
          %v1168 = vunpack.c.l.b16 %v1160
          %v1169 = vunpack.c.l.b16 %v1161
          %v1170 = vunpack.c.l.b16 %v1162
          %v1171 = vunpack.c.l.b16 %v1163
          %v1172 = vpack.c.b16 %v1169, %v1168
          %v1173 = vpack.c.b16 %v1171, %v1170
          %1176 = vst [vmem:[#allocation8] sm:$0xff] %v1172
          %1177 = vst [vmem:[#allocation8 + $0x8] sm:$0xff] %v1173
        $region56: #{tpu_custom_call.1} parent=39 // pred_fallthru
          _
        // Predicated region
        $region57: #{tpu_custom_call.1} parent=39 // pred_check
          %p1178 = pneg %p185
        $region58: #{tpu_custom_call.1} parent=39 // pred_check_branch
          %1180 = sbr.rel (%p1178) target = $region60
        $region59: #{tpu_custom_call.1} parent=39 // pred_region
          %s1181 = smul.u32 4, %s27
          %s1183 = ssub.s32 256, 256
          %1184 = vsyncadd [#allocation5], %s1183
          %s1185 = smul.addr %s1181, 64
          %s1186 = scalar_lea.hbm %s5, %s1185
          %s1188 = sshll.u32 [#allocation8], 4
          %s1189 = int_to_ptr.vmem [resolvable:$true] %s1188
          %1191 = dma.vmem_to_hbm [thread:$0]  %s1189, 256, %s1186, [#allocation5]
        $region60: #{tpu_custom_call.1} parent=39 // pred_fallthru
          _
        // Predicated region
        $region61: #{tpu_custom_call.1} parent=39 // pred_check
          %p1192 = pneg %p185
        $region62: #{tpu_custom_call.1} parent=39 // pred_check_branch
          %1194 = sbr.rel (%p1192) target = $region64
        $region63: #{tpu_custom_call.1} parent=39 // pred_region
          %1195 = dma.done [#allocation5], 256
        $region64: #{tpu_custom_call.1} parent=39 // pred_fallthru
          _
      $region40: #{tpu_custom_call.1} parent=5 // pred_fallthru
        _
      %p1196 = scmp.le.s32.totalorder 2, %s18
      // Predicated region
      $region65: #{tpu_custom_call.1} parent=5 // pred_check
        %p1197 = pneg %p1196
      $region66: #{tpu_custom_call.1} parent=5 // pred_check_branch
        %1199 = sbr.rel (%p1197) target = $region68
      $region67: #{tpu_custom_call.1} parent=5 // pred_region
        %s1200 = ssub.s32 %s18, 2
      $region68: #{tpu_custom_call.1} parent=5 // pred_fallthru
        _
    $region6: #{tpu_custom_call.1} parent=1 // loop_footer
      %s22 = sadd.s32 1, %s18
    $region7: #{tpu_custom_call.1} parent=1 // loop_footer_branch
      %17 = sbr.rel target = $region3
    $region8: #{tpu_custom_call.1} parent=1 // loop_exit
      _
    %1201 = vsyncpa [#allocation4], 1
    %s1202 = scalar_lea.sflag [#allocation4], 1
    %1203 = vsyncpa %s1202, 1
    %1204 = vsyncpa [#allocation7], 1
    %s1205 = scalar_lea.sflag [#allocation7], 1
    %1206 = vsyncpa %s1205, 1
    %1207 = vsyncpa [#allocation5], 1
    %s1208 = scalar_lea.sflag [#allocation5], 1
    %1209 = vsyncpa %s1208, 1

</llo_original>
